<compile_context>
chip_gen: v5e
topology: v5e:2x2
jax: 0.10.0
libtpu: 0.0.40
codegen_flags: <defaults>
</compile_context>

<pallas_src>
import jax
import jax.numpy as jnp
from jax.experimental import pallas as pl
from jax.experimental.pallas import tpu as pltpu

# Dimensions implied by the module (small & MXU/VPU friendly).
DIM_IN = 32
DIM_HIDDEN_1 = 64
DIM_HIDDEN_2 = 64
DIM_HIDDEN_3 = 64
DIM_OUT = 16

MAX_BATCH_TILE = 2048    # large-batch tile: near HBM roofline, tiny VMEM cost
SINGLE_STEP_MAX = 1024   # batches up to this size run as one grid step


def _round_up(n, m):
    return ((n + m - 1) // m) * m


def mlp_kernel(x_ref,
               w12_ref, b12_ref,
               w3_ref, b3_ref,
               w4_ref, b4_ref,
               o_ref):
    # hidden1 + hidden2 folded into one Linear (exact up to f32 rounding)
    h = jnp.dot(x_ref[...], w12_ref[...],
                preferred_element_type=jnp.float32) + b12_ref[...]
    # hidden3: ReLU
    h = jnp.maximum(h, 0.0)
    # hidden4: Linear
    h = jnp.dot(h, w3_ref[...],
                preferred_element_type=jnp.float32) + b3_ref[...]
    # hidden5: ReLU
    h = jnp.maximum(h, 0.0)
    # out: Linear, written at its natural (DIM_OUT) width
    o_ref[...] = (jnp.dot(h, w4_ref[...],
                          preferred_element_type=jnp.float32)
                  + b4_ref[...]).astype(o_ref.dtype)


def fold_params(params):
    """Offline param prep: fold Linear1 @ Linear2 into a single Linear."""
    w12 = params["w1"] @ params["w2"]                   # (DIM_IN, H2)
    b12 = params["b1"] @ params["w2"] + params["b2"]    # (1, H2)
    return {"w12": w12, "b12": b12,
            "w3": params["w3"], "b3": params["b3"],
            "w4": params["w4"], "b4": params["b4"]}


def _choose_batch_tile(B):
    """Pick the batch tile.

    - Small batch: a single grid step covering all rows (block shape equal to
      the full array dim is always legal, even if B % 8 != 0).
    - Large batch: big tiles (amortize ~600-cycle per-step overhead, approach
      HBM roofline) but always >= 2 grid steps so the 'parallel' axis can
      shard across both v7x TensorCores.
    """
    if B <= SINGLE_STEP_MAX:
        return B
    return min(MAX_BATCH_TILE, _round_up(pl.cdiv(B, 2), 8))


def net_forward(x, fparams):
    """x: (B, DIM_IN) float32; fparams: output of fold_params()."""
    B = x.shape[0]
    tile_b = _choose_batch_tile(B)
    grid = (pl.cdiv(B, tile_b),)   # ragged tail handled by boundary masking

    def resident(arr):
        # Whole (small) weight/bias resident in VMEM; same block every step,
        # so Pallas only DMAs it once.
        return pl.BlockSpec(arr.shape, lambda i: (0, 0))

    in_specs = [
        pl.BlockSpec((tile_b, DIM_IN), lambda i: (i, 0)),  # x tile
        resident(fparams["w12"]), resident(fparams["b12"]),
        resident(fparams["w3"]), resident(fparams["b3"]),
        resident(fparams["w4"]), resident(fparams["b4"]),
    ]
    # Output at its natural width: last dim (16) equals the full array dim,
    # so the block spec is legal and there is no padded writeback or slice.
    out_spec = pl.BlockSpec((tile_b, DIM_OUT), lambda i: (i, 0))

    return pl.pallas_call(
        mlp_kernel,
        out_shape=jax.ShapeDtypeStruct((B, DIM_OUT), jnp.float32),
        grid_spec=pltpu.PrefetchScalarGridSpec(
            num_scalar_prefetch=0,
            grid=grid,
            in_specs=in_specs,
            out_specs=out_spec,
        ),
        compiler_params=pltpu.CompilerParams(
            dimension_semantics=("parallel",)),
    )(x,
      fparams["w12"], fparams["b12"],
      fparams["w3"], fparams["b3"],
      fparams["w4"], fparams["b4"])


def init_params(key):
    """Deterministic init mimicking nn.Linear's U(-1/sqrt(fan_in), 1/sqrt(fan_in)).
    Weights are stored transposed: (in_features, out_features)."""
    dims = [(DIM_IN, DIM_HIDDEN_1),
            (DIM_HIDDEN_1, DIM_HIDDEN_2),
            (DIM_HIDDEN_2, DIM_HIDDEN_3),
            (DIM_HIDDEN_3, DIM_OUT)]
    params = {}
    keys = jax.random.split(key, 2 * len(dims))
    for idx, (d_in, d_out) in enumerate(dims):
        bound = 1.0 / jnp.sqrt(jnp.float32(d_in))
        w = jax.random.uniform(keys[2 * idx], (d_in, d_out),
                               minval=-bound, maxval=bound, dtype=jnp.float32)
        b = jax.random.uniform(keys[2 * idx + 1], (1, d_out),
                               minval=-bound, maxval=bound, dtype=jnp.float32)
        params[f"w{idx + 1}"] = w
        params[f"b{idx + 1}"] = b
    return params


def reference_forward(x, p):
    h = x @ p["w1"] + p["b1"]
    h = h @ p["w2"] + p["b2"]
    h = jnp.maximum(h, 0.0)
    h = h @ p["w3"] + p["b3"]
    h = jnp.maximum(h, 0.0)
    return h @ p["w4"] + p["b4"]


if __name__ == "__main__":
    key = jax.random.PRNGKey(0)
    k_x, k_p = jax.random.split(key)
    batch = 16
    x = jax.random.normal(k_x, (batch, DIM_IN), dtype=jnp.float32)
    params = init_params(k_p)
    fparams = fold_params(params)   # offline Linear1@Linear2 folding

    out = net_forward(x, fparams)
    out = jax.block_until_ready(out)

    ref = reference_forward(x, params)
    assert out.shape == (batch, DIM_OUT)
    assert jnp.allclose(out, ref, atol=1e-4, rtol=1e-4), "mismatch vs reference"

    print("KERNEL_OK")
</pallas_src>

<mosaic_0001>
module attributes {stable_mosaic.version = 11 : i64} {
  func.func @mlp_kernel(%arg0: i32, %arg1: memref<16x32xf32, #tpu.memory_space<vmem>>, %arg2: memref<32x64xf32, #tpu.memory_space<vmem>>, %arg3: memref<1x64xf32, #tpu.memory_space<vmem>>, %arg4: memref<64x64xf32, #tpu.memory_space<vmem>>, %arg5: memref<1x64xf32, #tpu.memory_space<vmem>>, %arg6: memref<64x16xf32, #tpu.memory_space<vmem>>, %arg7: memref<1x16xf32, #tpu.memory_space<vmem>>, %arg8: memref<16x16xf32, #tpu.memory_space<vmem>>) attributes {dimension_semantics = [#tpu.dimension_semantics<parallel>], iteration_bounds = array<i64: 1>, scalar_prefetch = 0 : i64, scratch_operands = 0 : i64, tpu.core_type = #tpu.core_type<tc>, window_params = [{transform_indices = @transform_0, window_bounds = array<i64: 16, 32>}, {pipeline_mode = #tpu.pipeline_mode<synchronous>, transform_indices = @transform_1, window_bounds = array<i64: 32, 64>}, {pipeline_mode = #tpu.pipeline_mode<synchronous>, transform_indices = @transform_2, window_bounds = array<i64: 1, 64>}, {pipeline_mode = #tpu.pipeline_mode<synchronous>, transform_indices = @transform_3, window_bounds = array<i64: 64, 64>}, {pipeline_mode = #tpu.pipeline_mode<synchronous>, transform_indices = @transform_4, window_bounds = array<i64: 1, 64>}, {pipeline_mode = #tpu.pipeline_mode<synchronous>, transform_indices = @transform_5, window_bounds = array<i64: 64, 16>}, {pipeline_mode = #tpu.pipeline_mode<synchronous>, transform_indices = @transform_6, window_bounds = array<i64: 1, 16>}, {transform_indices = @transform_7, window_bounds = array<i64: 16, 16>}]} {
    %c0 = arith.constant 0 : index
    %c0_0 = arith.constant 0 : index
    %0 = vector.load %arg1[%c0, %c0_0] : memref<16x32xf32, #tpu.memory_space<vmem>>, vector<16x32xf32>
    %c0_1 = arith.constant 0 : index
    %c0_2 = arith.constant 0 : index
    %1 = vector.load %arg2[%c0_1, %c0_2] : memref<32x64xf32, #tpu.memory_space<vmem>>, vector<32x64xf32>
    %cst = arith.constant dense<0.000000e+00> : vector<16x64xf32>
    %2 = tpu.matmul %0, %1, %cst {dimension_numbers = #tpu.dot_dimension_numbers<[1], [0], [0], [1], [0, 0, 1, 1], [], []>} : vector<16x32xf32>, vector<32x64xf32>, vector<16x64xf32> -> vector<16x64xf32>
    %c0_3 = arith.constant 0 : index
    %c0_4 = arith.constant 0 : index
    %3 = vector.load %arg3[%c0_3, %c0_4] : memref<1x64xf32, #tpu.memory_space<vmem>>, vector<1x64xf32>
    %4 = vector.broadcast %3 : vector<1x64xf32> to vector<16x64xf32>
    %5 = arith.addf %2, %4 : vector<16x64xf32>
    %cst_5 = arith.constant 0.000000e+00 : f32
    %6 = vector.broadcast %cst_5 : f32 to vector<16x64xf32>
    %7 = arith.maximumf %5, %6 : vector<16x64xf32>
    %c0_6 = arith.constant 0 : index
    %c0_7 = arith.constant 0 : index
    %8 = vector.load %arg4[%c0_6, %c0_7] : memref<64x64xf32, #tpu.memory_space<vmem>>, vector<64x64xf32>
    %cst_8 = arith.constant dense<0.000000e+00> : vector<16x64xf32>
    %9 = tpu.matmul %7, %8, %cst_8 {dimension_numbers = #tpu.dot_dimension_numbers<[1], [0], [0], [1], [0, 0, 1, 1], [], []>} : vector<16x64xf32>, vector<64x64xf32>, vector<16x64xf32> -> vector<16x64xf32>
    %c0_9 = arith.constant 0 : index
    %c0_10 = arith.constant 0 : index
    %10 = vector.load %arg5[%c0_9, %c0_10] : memref<1x64xf32, #tpu.memory_space<vmem>>, vector<1x64xf32>
    %11 = vector.broadcast %10 : vector<1x64xf32> to vector<16x64xf32>
    %12 = arith.addf %9, %11 : vector<16x64xf32>
    %cst_11 = arith.constant 0.000000e+00 : f32
    %13 = vector.broadcast %cst_11 : f32 to vector<16x64xf32>
    %14 = arith.maximumf %12, %13 : vector<16x64xf32>
    %c0_12 = arith.constant 0 : index
    %c0_13 = arith.constant 0 : index
    %15 = vector.load %arg6[%c0_12, %c0_13] : memref<64x16xf32, #tpu.memory_space<vmem>>, vector<64x16xf32>
    %cst_14 = arith.constant dense<0.000000e+00> : vector<16x16xf32>
    %16 = tpu.matmul %14, %15, %cst_14 {dimension_numbers = #tpu.dot_dimension_numbers<[1], [0], [0], [1], [0, 0, 1, 1], [], []>} : vector<16x64xf32>, vector<64x16xf32>, vector<16x16xf32> -> vector<16x16xf32>
    %c0_15 = arith.constant 0 : index
    %c0_16 = arith.constant 0 : index
    %17 = vector.load %arg7[%c0_15, %c0_16] : memref<1x16xf32, #tpu.memory_space<vmem>>, vector<1x16xf32>
    %18 = vector.broadcast %17 : vector<1x16xf32> to vector<16x16xf32>
    %19 = arith.addf %16, %18 : vector<16x16xf32>
    %c0_17 = arith.constant 0 : index
    %c0_18 = arith.constant 0 : index
    %20 = vector.load %arg8[%c0_17, %c0_18] : memref<16x16xf32, #tpu.memory_space<vmem>>, vector<16x16xf32>
    tpu.vector_store %arg8[%c0_17, %c0_18], %19 {strides = array<i32>} : memref<16x16xf32, #tpu.memory_space<vmem>>, vector<16x16xf32>,
    return
  }
  func.func @transform_0(%arg0: i32) -> (i32, i32) {
    %c0_i32 = arith.constant 0 : i32
    %c0_i32_0 = arith.constant 0 : i32
    return %arg0, %c0_i32 : i32, i32
  }
  func.func @transform_1(%arg0: i32) -> (i32, i32) {
    %c0_i32 = arith.constant 0 : i32
    %c0_i32_0 = arith.constant 0 : i32
    %c0_i32_1 = arith.constant 0 : i32
    return %c0_i32, %c0_i32_0 : i32, i32
  }
  func.func @transform_2(%arg0: i32) -> (i32, i32) {
    %c0_i32 = arith.constant 0 : i32
    %c0_i32_0 = arith.constant 0 : i32
    %c0_i32_1 = arith.constant 0 : i32
    return %c0_i32, %c0_i32_0 : i32, i32
  }
  func.func @transform_3(%arg0: i32) -> (i32, i32) {
    %c0_i32 = arith.constant 0 : i32
    %c0_i32_0 = arith.constant 0 : i32
    %c0_i32_1 = arith.constant 0 : i32
    return %c0_i32, %c0_i32_0 : i32, i32
  }
  func.func @transform_4(%arg0: i32) -> (i32, i32) {
    %c0_i32 = arith.constant 0 : i32
    %c0_i32_0 = arith.constant 0 : i32
    %c0_i32_1 = arith.constant 0 : i32
    return %c0_i32, %c0_i32_0 : i32, i32
  }
  func.func @transform_5(%arg0: i32) -> (i32, i32) {
    %c0_i32 = arith.constant 0 : i32
    %c0_i32_0 = arith.constant 0 : i32
    %c0_i32_1 = arith.constant 0 : i32
    return %c0_i32, %c0_i32_0 : i32, i32
  }
  func.func @transform_6(%arg0: i32) -> (i32, i32) {
    %c0_i32 = arith.constant 0 : i32
    %c0_i32_0 = arith.constant 0 : i32
    %c0_i32_1 = arith.constant 0 : i32
    return %c0_i32, %c0_i32_0 : i32, i32
  }
  func.func @transform_7(%arg0: i32) -> (i32, i32) {
    %c0_i32 = arith.constant 0 : i32
    %c0_i32_0 = arith.constant 0 : i32
    return %arg0, %c0_i32 : i32, i32
  }
}

</mosaic_0001>

<llo_original>
// kernel: tpu_custom_call.1
$region0: #{tpu_custom_call.1}
  #allocation0 [shape = 'u32[]', space=smem, size = 0x4, offset = 0x4, fixed_abs, tag = 'smem constant byte address 0x4 - core index']
  #allocation1 [shape = 'u32[72,128]{1,0:T(1,128)}', space=vmem, size = 0x9000, scoped, tag = 'internal scratch']
  %s0 = inlined_call_operand.vmem [shape: f32[16,32], index: 0, kind: input, shape index: {}]
  %s1 = inlined_call_operand.hbm [shape: f32[32,64], index: 1, kind: input, shape index: {}]
  %s2 = inlined_call_operand.vmem [shape: f32[1,64], index: 2, kind: input, shape index: {}]
  %s3 = inlined_call_operand.vmem [shape: f32[64,64], index: 3, kind: input, shape index: {}]
  %s4 = inlined_call_operand.vmem [shape: f32[1,64], index: 4, kind: input, shape index: {}]
  %s5 = inlined_call_operand.vmem [shape: f32[64,16], index: 5, kind: input, shape index: {}]
  %s6 = inlined_call_operand.vmem [shape: f32[1,16], index: 6, kind: input, shape index: {}]
  %s7 = inlined_call_operand.hbm [shape: f32[16,16], index: 7, kind: output, shape index: {}]
  %s8 = sld [smem:[#allocation0]]
  $region42: #{tpu_custom_call.1} parent=0
    _
  %s10 = ssub.s32 1, %s8
  %s11 = scalar_select 0, %s10, %s8
  $region1: #{tpu_custom_call.1} parent=0
    #allocation2 [shape = 'u8[16384]{0}', space=vmem, size = 0x4000, scoped, tag = 'input window, operand 1, single buffered']
    #allocation3 [shape = 's32[1]{0}', space=sflag, size = 0x4, scoped, tag = 'scoped memory for tpu_custom_call.1']
    #allocation4 [shape = 's32[1]{0}', space=sflag, size = 0x4, scoped, tag = 'scoped memory for tpu_custom_call.1']
    #allocation5 [shape = 'u8[8192]{0}', space=vmem, size = 0x2000, scoped, tag = 'output window, operand 0, single buffered']
    %12 = vsyncpa [#allocation3], 0
    %13 = vsyncpa [#allocation4], 0
    // Predicated region
    $region2: #{tpu_custom_call.1} parent=1 // pred_check
      _
    $region3: #{tpu_custom_call.1} parent=1 // pred_check_branch
      %15 = sbr.rel (0) target = $region5
    $region4: #{tpu_custom_call.1} parent=1 // pred_region
      _
    $region5: #{tpu_custom_call.1} parent=1 // pred_fallthru
      _
    // Predicated region
    $region6: #{tpu_custom_call.1} parent=1 // pred_check
      _
    $region7: #{tpu_custom_call.1} parent=1 // pred_check_branch
      %17 = sbr.rel (0) target = $region9
    $region8: #{tpu_custom_call.1} parent=1 // pred_region
      %19 = vsyncadd [#allocation3], 0
      %s20 = sshll.u32 %s1, 4
      %s21 = int_to_ptr.hbm [resolvable:$true] %s20
      %s22 = sshll.u32 [#allocation2], 4
      %s23 = int_to_ptr.vmem [resolvable:$true] %s22
      %28 = dma.hbm_to_vmem [thread:$0]  %s21, 512, %s23, [#allocation3], 128, 128, 8
    $region9: #{tpu_custom_call.1} parent=1 // pred_fallthru
      _
    // Predicated region
    $region10: #{tpu_custom_call.1} parent=1 // pred_check
      _
    $region11: #{tpu_custom_call.1} parent=1 // pred_check_branch
      %30 = sbr.rel (0) target = $region13
    $region12: #{tpu_custom_call.1} parent=1 // pred_region
      _
    $region13: #{tpu_custom_call.1} parent=1 // pred_fallthru
      _
    // Predicated region
    $region14: #{tpu_custom_call.1} parent=1 // pred_check
      _
    $region15: #{tpu_custom_call.1} parent=1 // pred_check_branch
      %32 = sbr.rel (0) target = $region17
    $region16: #{tpu_custom_call.1} parent=1 // pred_region
      _
    $region17: #{tpu_custom_call.1} parent=1 // pred_fallthru
      _
    // Predicated region
    $region18: #{tpu_custom_call.1} parent=1 // pred_check
      _
    $region19: #{tpu_custom_call.1} parent=1 // pred_check_branch
      %34 = sbr.rel (0) target = $region21
    $region20: #{tpu_custom_call.1} parent=1 // pred_region
      _
    $region21: #{tpu_custom_call.1} parent=1 // pred_fallthru
      _
    // Predicated region
    $region22: #{tpu_custom_call.1} parent=1 // pred_check
      _
    $region23: #{tpu_custom_call.1} parent=1 // pred_check_branch
      %36 = sbr.rel (0) target = $region25
    $region24: #{tpu_custom_call.1} parent=1 // pred_region
      _
    $region25: #{tpu_custom_call.1} parent=1 // pred_fallthru
      _
    // Predicated region
    $region26: #{tpu_custom_call.1} parent=1 // pred_check
      _
    $region27: #{tpu_custom_call.1} parent=1 // pred_check_branch
      %38 = sbr.rel (0) target = $region29
    $region28: #{tpu_custom_call.1} parent=1 // pred_region
      _
    $region29: #{tpu_custom_call.1} parent=1 // pred_fallthru
      _
    // Predicated region
    $region30: #{tpu_custom_call.1} parent=1 // pred_check
      _
    $region31: #{tpu_custom_call.1} parent=1 // pred_check_branch
      %40 = sbr.rel (0) target = $region33
    $region32: #{tpu_custom_call.1} parent=1 // pred_region
      %42 = dma.done [#allocation3], 512
    $region33: #{tpu_custom_call.1} parent=1 // pred_fallthru
      _
    %v43 = vld [vmem:[%s0] sm:$0xff]
    %v44 = vld [vmem:[%s0 + $0x8] sm:$0xff]
    %v45 = vld [vmem:[#allocation2] sm:$0xff]
    %v46 = vld [vmem:[#allocation2 + $0x8] sm:$0xff]
    %v47 = vld [vmem:[#allocation2 + $0x10] sm:$0xff]
    %v48 = vld [vmem:[#allocation2 + $0x18] sm:$0xff]
    %v49 = vld [vmem:[%s2] sm:$0x1]
    %v51 = vperm.slane %v49, 0
    %vm53 = vcmask 261120
    %v55 = vsel %vm53, %v43, 0
    %v58 = vsel %vm53, %v44, 0
    %60 = vmatpush.msra.mxu0 0.0
    %61 = vmatpush.msra.mxu0 0.0
    %62 = vmatpush.msra.mxu0 0.0
    %63 = vmatpush.msra.mxu0 0.0
    %64 = vmatpush.msra.mxu0 0.0
    %65 = vmatpush.msra.mxu0 0.0
    %66 = vmatpush.msra.mxu0 0.0
    %67 = vmatpush.msra.mxu0 0.0
    %68 = vmatpush.msra.mxu0 0.0
    %69 = vmatpush.msra.mxu0 0.0
    %70 = vmatpush.msra.mxu0 0.0
    %71 = vmatpush.msra.mxu0 0.0
    %72 = vmatpush.msra.mxu0 %v48
    %73 = vmatpush.msra.mxu0 %v47
    %74 = vmatpush.msra.mxu0 %v46
    %75 = vmatpush.msra.mxu0 %v45
    %76 = vmatmul.f32.gmra.mxu0 %v55
    %v77 = vpop.f32.mrf.mxu0
    %v78 = vadd.f32 %v51, %v77
    %79 = vmatmul.f32.gmra.mxu0 %v58
    %v80 = vpop.f32.mrf.mxu0
    %v81 = vadd.f32 %v51, %v80
    %82 = vdwg.mxu0
    %v83 = vmax.f32 %v78, 0.0
    %v84 = vmax.f32 %v81, 0.0
    %v85 = vld [vmem:[%s3] sm:$0xff]
    %v86 = vld [vmem:[%s3 + $0x8] sm:$0xff]
    %v87 = vld [vmem:[%s3 + $0x10] sm:$0xff]
    %v88 = vld [vmem:[%s3 + $0x18] sm:$0xff]
    %v89 = vld [vmem:[%s3 + $0x20] sm:$0xff]
    %v90 = vld [vmem:[%s3 + $0x28] sm:$0xff]
    %v91 = vld [vmem:[%s3 + $0x30] sm:$0xff]
    %v92 = vld [vmem:[%s3 + $0x38] sm:$0xff]
    %v93 = vld [vmem:[%s4] sm:$0x1]
    %v95 = vperm.slane %v93, 0
    %vm97 = vcmask 523264
    %v99 = vsel %vm97, %v83, 0
    %v102 = vsel %vm97, %v84, 0
    %104 = vmatpush.msra.mxu0 0.0
    %105 = vmatpush.msra.mxu0 0.0
    %106 = vmatpush.msra.mxu0 0.0
    %107 = vmatpush.msra.mxu0 0.0
    %108 = vmatpush.msra.mxu0 0.0
    %109 = vmatpush.msra.mxu0 0.0
    %110 = vmatpush.msra.mxu0 0.0
    %111 = vmatpush.msra.mxu0 0.0
    %112 = vmatpush.msra.mxu0 %v92
    %113 = vmatpush.msra.mxu0 %v91
    %114 = vmatpush.msra.mxu0 %v90
    %115 = vmatpush.msra.mxu0 %v89
    %116 = vmatpush.msra.mxu0 %v88
    %117 = vmatpush.msra.mxu0 %v87
    %118 = vmatpush.msra.mxu0 %v86
    %119 = vmatpush.msra.mxu0 %v85
    %120 = vmatmul.f32.gmra.mxu0 %v99
    %v121 = vpop.f32.mrf.mxu0
    %v122 = vadd.f32 %v95, %v121
    %123 = vmatmul.f32.gmra.mxu0 %v102
    %v124 = vpop.f32.mrf.mxu0
    %v125 = vadd.f32 %v95, %v124
    %126 = vdwg.mxu0
    %v127 = vmax.f32 %v122, 0.0
    %v128 = vmax.f32 %v125, 0.0
    %v129 = vld [vmem:[%s5] sm:$0xff]
    %v130 = vld [vmem:[%s5 + $0x8] sm:$0xff]
    %v131 = vld [vmem:[%s5 + $0x10] sm:$0xff]
    %v132 = vld [vmem:[%s5 + $0x18] sm:$0xff]
    %v133 = vld [vmem:[%s5 + $0x20] sm:$0xff]
    %v134 = vld [vmem:[%s5 + $0x28] sm:$0xff]
    %v135 = vld [vmem:[%s5 + $0x30] sm:$0xff]
    %v136 = vld [vmem:[%s5 + $0x38] sm:$0xff]
    %v137 = vld [vmem:[%s6] sm:$0x1]
    %v139 = vperm.slane %v137, 0
    %v142 = vsel %vm97, %v127, 0
    %v145 = vsel %vm97, %v128, 0
    %147 = vmatpush.msra.mxu0 0.0
    %148 = vmatpush.msra.mxu0 0.0
    %149 = vmatpush.msra.mxu0 0.0
    %150 = vmatpush.msra.mxu0 0.0
    %151 = vmatpush.msra.mxu0 0.0
    %152 = vmatpush.msra.mxu0 0.0
    %153 = vmatpush.msra.mxu0 0.0
    %154 = vmatpush.msra.mxu0 0.0
    %155 = vmatpush.msra.mxu0 %v136
    %156 = vmatpush.msra.mxu0 %v135
    %157 = vmatpush.msra.mxu0 %v134
    %158 = vmatpush.msra.mxu0 %v133
    %159 = vmatpush.msra.mxu0 %v132
    %160 = vmatpush.msra.mxu0 %v131
    %161 = vmatpush.msra.mxu0 %v130
    %162 = vmatpush.msra.mxu0 %v129
    %163 = vmatmul.f32.gmra.mxu0 %v142
    %v164 = vpop.f32.mrf.mxu0
    %v165 = vadd.f32 %v139, %v164
    %166 = vmatmul.f32.gmra.mxu0 %v145
    %v167 = vpop.f32.mrf.mxu0
    %v168 = vadd.f32 %v139, %v167
    %169 = vdwg.mxu0
    %vm170 = vcmask 130048
    %171 = vst.msk [vmem:[#allocation5] sm:$0xff] %vm170, %v165
    %172 = vst.msk [vmem:[#allocation5 + $0x8] sm:$0xff] %vm170, %v168
    // Predicated region
    $region34: #{tpu_custom_call.1} parent=1 // pred_check
      _
    $region35: #{tpu_custom_call.1} parent=1 // pred_check_branch
      %174 = sbr.rel (0) target = $region37
    $region36: #{tpu_custom_call.1} parent=1 // pred_region
      %176 = vsyncadd [#allocation4], 0
      %s177 = sshll.u32 [#allocation5], 4
      %s178 = int_to_ptr.vmem [resolvable:$true] %s177
      %s179 = sshll.u32 %s7, 4
      %s180 = int_to_ptr.hbm [resolvable:$true] %s179
      %185 = dma.vmem_to_hbm [thread:$0]  %s178, 256, %s180, [#allocation4], 128, 128, 8
    $region37: #{tpu_custom_call.1} parent=1 // pred_fallthru
      _
    // Predicated region
    $region38: #{tpu_custom_call.1} parent=1 // pred_check
      _
    $region39: #{tpu_custom_call.1} parent=1 // pred_check_branch
      %187 = sbr.rel (0) target = $region41
    $region40: #{tpu_custom_call.1} parent=1 // pred_region
      %189 = dma.done [#allocation4], 256
    $region41: #{tpu_custom_call.1} parent=1 // pred_fallthru
      _
    %190 = vsyncpa [#allocation3], 1
    %191 = vsyncpa [#allocation4], 1

</llo_original>
